<compile_context>
chip_gen: v7x
topology: tpu7x:2x2x1
jax: 0.10.0
libtpu: 0.0.40
codegen_flags: <defaults>
</compile_context>

<pallas_src>
import functools

import jax
import jax.numpy as jnp
from jax.experimental import pallas as pl
from jax.experimental.pallas import tpu as pltpu


def _round_up(x, m):
    return (x + m - 1) // m * m


def norm_linear_kernel(x_ref, scale_ref, shift_ref, w_ref, b_ref, o_ref, acc_ref):
    # x_ref     : VMEM (tn, ck)   float32   raw (un-normalized) activations
    # scale_ref : VMEM (1, ck)    float32   1/std, broadcast per input column
    # shift_ref : VMEM (1, ck)    float32   mean/std, broadcast per input column
    # w_ref     : VMEM (ck, tk)   bfloat16
    # b_ref     : VMEM (1, tk)    float32
    # o_ref     : VMEM (tn, tk)   float32
    # acc_ref   : VMEM (tn, tk)   float32   accumulator across the CHW axis
    k = pl.program_id(2)

    @pl.when(k == 0)
    def _():
        acc_ref[...] = jnp.zeros_like(acc_ref)

    # Per-channel normalization on the VPU in f32 (free under the MXU), then
    # cast to bf16 for the MXU with f32 accumulation.
    xn = (x_ref[...] * scale_ref[...] - shift_ref[...]).astype(jnp.bfloat16)
    acc_ref[...] += jnp.dot(xn, w_ref[...], preferred_element_type=jnp.float32)

    @pl.when(k == pl.num_programs(2) - 1)
    def _():
        o_ref[...] = acc_ref[...] + b_ref[...]


def choose_tiles(N, K, CHW):
    # N: keep a single tile when possible so the weight streams from HBM once.
    if N <= 256:
        Np = _round_up(N, 16)     # 16: bf16 LHS packs two rows per sublane
        tn = Np
    else:
        Np = _round_up(N, 256)
        tn = 256
    # K: 256-wide tiles match the v6e/v7x 2x256^2 MXU; single (128/256) tile
    # when K is small (v5e's 4x128^2 MXU handles 256 in two passes).
    if K > 256:
        tk = 256
        Kp = _round_up(K, 256)
    else:
        Kp = _round_up(K, 128)
        tk = Kp
    # CHW (contraction): cap at 4096 so double-buffered inputs stay ~13 MiB at
    # tn=tk=256 -- fits v7x's 64 MiB VMEM with headroom.
    CK_MAX = 4096
    if CHW <= CK_MAX:
        CHWp = _round_up(CHW, 128)
        ck = CHWp
    else:
        CHWp = _round_up(CHW, CK_MAX)
        ck = CK_MAX
    return dict(tn=tn, tk=tk, ck=ck, Np=Np, Kp=Kp, CHWp=CHWp)


def prepare_params(w, b, mean, std, H, W, Kp, CHWp):
    """One-time, per-model parameter prep (hoisted out of the per-call path):
    pad + bf16-cast the weight, pad the bias, build per-column normalization
    vectors.  No folded/padded f32 weight temp is materialized."""
    CHW, K = w.shape
    wp = jnp.pad(w.astype(jnp.bfloat16), ((0, CHWp - CHW), (0, Kp - K)))
    bp = jnp.pad(b.astype(jnp.float32), (0, Kp - K)).reshape(1, Kp)
    inv_std = (1.0 / std).astype(jnp.float32)
    scale = jnp.repeat(inv_std, H * W)                             # (CHW,)
    shift = jnp.repeat(mean.astype(jnp.float32) * inv_std, H * W)  # (CHW,)
    scale_p = jnp.pad(scale, (0, CHWp - CHW)).reshape(1, CHWp)
    shift_p = jnp.pad(shift, (0, CHWp - CHW)).reshape(1, CHWp)
    return wp, bp, scale_p, shift_p


def wrapped_forward(x_nchw, wp, bp, scale_p, shift_p, *, tiles, n_out, k_out):
    """Per-call path: pad x, run the tiled norm+linear kernel, slice result."""
    N = x_nchw.shape[0]
    CHW = x_nchw.shape[1] * x_nchw.shape[2] * x_nchw.shape[3]
    tn, tk, ck = tiles["tn"], tiles["tk"], tiles["ck"]
    Np, Kp, CHWp = tiles["Np"], tiles["Kp"], tiles["CHWp"]

    # x stays f32 into the kernel: normalization is done in-kernel in f32
    # before the bf16 cast (x is small next to W at production shapes).
    x2 = x_nchw.reshape(N, CHW).astype(jnp.float32)
    xp = jnp.pad(x2, ((0, Np - N), (0, CHWp - CHW)))

    grid = (Np // tn, Kp // tk, CHWp // ck)

    # Explicit scoped-VMEM budget: double-buffered inputs + outputs + acc.
    step_in = tn * ck * 4 + ck * tk * 2 + 2 * ck * 4 + tk * 4
    step_out = tn * tk * 4
    need = 2 * step_in + 2 * step_out + tn * tk * 4
    vmem_limit = int(min(max(2 * need, 32 * 1024 * 1024), 64 * 1024 * 1024))

    cost = pl.CostEstimate(
        flops=2 * Np * Kp * CHWp,
        transcendentals=0,
        bytes_accessed=(Np * CHWp * 4                      # x (f32)
                        + (Np // tn) * CHWp * Kp * 2       # W streams (bf16)
                        + Np * Kp * 4),                    # output (f32)
    )

    out_p = pl.pallas_call(
        norm_linear_kernel,
        out_shape=jax.ShapeDtypeStruct((Np, Kp), jnp.float32),
        grid_spec=pltpu.PrefetchScalarGridSpec(
            num_scalar_prefetch=0,
            grid=grid,
            in_specs=[
                pl.BlockSpec((tn, ck), lambda i, j, k: (i, k)),   # x
                pl.BlockSpec((1, ck), lambda i, j, k: (0, k)),    # scale
                pl.BlockSpec((1, ck), lambda i, j, k: (0, k)),    # shift
                # TODO(synk): once clearly W-stream bound at production shapes,
                # try pipeline_mode=pl.Buffered(3) on the weight spec.
                pl.BlockSpec((ck, tk), lambda i, j, k: (k, j)),   # w
                pl.BlockSpec((1, tk), lambda i, j, k: (0, j)),    # bias
            ],
            out_specs=pl.BlockSpec((tn, tk), lambda i, j, k: (i, j)),
            scratch_shapes=[pltpu.VMEM((tn, tk), jnp.float32)],
        ),
        compiler_params=pltpu.CompilerParams(
            dimension_semantics=("parallel", "parallel", "arbitrary"),
            vmem_limit_bytes=vmem_limit,
        ),
        cost_estimate=cost,
    )(xp, scale_p, shift_p, wp, bp)

    return out_p[:n_out, :k_out]


if __name__ == "__main__":
    # CIFAR-like NCHW input; mean/std of the module are 3-channel.
    N, C, H, W = 2, 3, 16, 16
    K = 10                       # linear classifier head standing in for `model`
    CHW = C * H * W

    key = jax.random.PRNGKey(0)
    kx, kw, kb = jax.random.split(key, 3)
    x = jax.random.uniform(kx, (N, C, H, W), dtype=jnp.float32)     # image in [0,1)
    w = jax.random.normal(kw, (CHW, K), dtype=jnp.float32) * 0.02
    b = jax.random.normal(kb, (K,), dtype=jnp.float32) * 0.01

    mean = jnp.array([0.4914, 0.4822, 0.4465], dtype=jnp.float32)
    std = jnp.array([0.2023, 0.1994, 0.201], dtype=jnp.float32)     # normalize=True

    tiles = choose_tiles(N, K, CHW)

    # One-time per-model prep (hoisted off the per-call path).
    params = prepare_params(w, b, mean, std, H, W, tiles["Kp"], tiles["CHWp"])
    params = jax.block_until_ready(params)
    wp, bp, scale_p, shift_p = params

    fwd = jax.jit(functools.partial(wrapped_forward, tiles=tiles, n_out=N, k_out=K))
    out = jax.block_until_ready(fwd(x, wp, bp, scale_p, shift_p))

    # Check 1: exact module semantics in f32 (tolerance covers bf16 matmul operands).
    xn_ref = (x - mean.reshape(1, C, 1, 1)) / std.reshape(1, C, 1, 1)
    ref_module = xn_ref.reshape(N, -1) @ w + b
    assert jnp.allclose(out, ref_module, atol=2e-2, rtol=2e-2), \
        "mismatch vs f32 module reference"

    # Check 2: kernel numerics (f32 normalization, bf16 operands, f32 accumulation).
    inv_std = 1.0 / std
    scale = jnp.repeat(inv_std, H * W)
    shift = jnp.repeat(mean * inv_std, H * W)
    xn_bf16 = (x.reshape(N, -1) * scale - shift).astype(jnp.bfloat16)
    ref_kernel = jnp.dot(xn_bf16, w.astype(jnp.bfloat16),
                         preferred_element_type=jnp.float32) + b
    assert jnp.allclose(out, ref_kernel, atol=1e-4, rtol=1e-4), \
        "mismatch vs bf16 kernel reference"

    print("KERNEL_OK")
</pallas_src>

<mosaic_0001>
module attributes {stable_mosaic.version = 11 : i64} {
  func.func @norm_linear_kernel(%arg0: i32, %arg1: i32, %arg2: i32, %arg3: memref<16x768xf32, #tpu.memory_space<vmem>>, %arg4: memref<1x768xf32, #tpu.memory_space<vmem>>, %arg5: memref<1x768xf32, #tpu.memory_space<vmem>>, %arg6: memref<768x128xbf16, #tpu.memory_space<vmem>>, %arg7: memref<1x128xf32, #tpu.memory_space<vmem>>, %arg8: memref<16x128xf32, #tpu.memory_space<vmem>>, %arg9: memref<16x128xf32, #tpu.memory_space<vmem>>) attributes {dimension_semantics = [#tpu.dimension_semantics<parallel>, #tpu.dimension_semantics<parallel>, #tpu.dimension_semantics<arbitrary>], iteration_bounds = array<i64: 1, 1, 1>, scalar_prefetch = 0 : i64, scratch_operands = 1 : i64, tpu.core_type = #tpu.core_type<tc>, window_params = [{transform_indices = @transform_0, window_bounds = array<i64: 16, 768>}, {transform_indices = @transform_1, window_bounds = array<i64: 1, 768>}, {transform_indices = @transform_2, window_bounds = array<i64: 1, 768>}, {transform_indices = @transform_3, window_bounds = array<i64: 768, 128>}, {transform_indices = @transform_4, window_bounds = array<i64: 1, 128>}, {transform_indices = @transform_5, window_bounds = array<i64: 16, 128>}]} {
    %c0_i32 = arith.constant 0 : i32
    %0 = arith.cmpi eq, %arg2, %c0_i32 : i32
    %1 = arith.extui %0 : i1 to i32
    %c0_i32_0 = arith.constant 0 : i32
    %2 = arith.cmpi ne, %1, %c0_i32_0 : i32
    scf.if %2 {
      %cst_14 = arith.constant 0.000000e+00 : f32
      %19 = vector.broadcast %cst_14 : f32 to vector<16x128xf32>
      %c0_15 = arith.constant 0 : index
      %c0_16 = arith.constant 0 : index
      %20 = vector.load %arg9[%c0_15, %c0_16] : memref<16x128xf32, #tpu.memory_space<vmem>>, vector<16x128xf32>
      tpu.vector_store %arg9[%c0_15, %c0_16], %19 {strides = array<i32>} : memref<16x128xf32, #tpu.memory_space<vmem>>, vector<16x128xf32>,
    } else {
    }
    %c0 = arith.constant 0 : index
    %c0_1 = arith.constant 0 : index
    %3 = vector.load %arg3[%c0, %c0_1] : memref<16x768xf32, #tpu.memory_space<vmem>>, vector<16x768xf32>
    %c0_2 = arith.constant 0 : index
    %c0_3 = arith.constant 0 : index
    %4 = vector.load %arg4[%c0_2, %c0_3] : memref<1x768xf32, #tpu.memory_space<vmem>>, vector<1x768xf32>
    %5 = vector.broadcast %4 : vector<1x768xf32> to vector<16x768xf32>
    %6 = arith.mulf %3, %5 : vector<16x768xf32>
    %c0_4 = arith.constant 0 : index
    %c0_5 = arith.constant 0 : index
    %7 = vector.load %arg5[%c0_4, %c0_5] : memref<1x768xf32, #tpu.memory_space<vmem>>, vector<1x768xf32>
    %8 = vector.broadcast %7 : vector<1x768xf32> to vector<16x768xf32>
    %9 = arith.subf %6, %8 : vector<16x768xf32>
    %10 = arith.truncf %9 : vector<16x768xf32> to vector<16x768xbf16>
    %c0_6 = arith.constant 0 : index
    %c0_7 = arith.constant 0 : index
    %11 = vector.load %arg9[%c0_6, %c0_7] : memref<16x128xf32, #tpu.memory_space<vmem>>, vector<16x128xf32>
    %c0_8 = arith.constant 0 : index
    %c0_9 = arith.constant 0 : index
    %12 = vector.load %arg6[%c0_8, %c0_9] : memref<768x128xbf16, #tpu.memory_space<vmem>>, vector<768x128xbf16>
    %cst = arith.constant dense<0.000000e+00> : vector<16x128xf32>
    %13 = tpu.matmul %10, %12, %cst {dimension_numbers = #tpu.dot_dimension_numbers<[1], [0], [0], [1], [0, 0, 1, 1], [], []>} : vector<16x768xbf16>, vector<768x128xbf16>, vector<16x128xf32> -> vector<16x128xf32>
    %14 = arith.addf %11, %13 : vector<16x128xf32>
    %c0_10 = arith.constant 0 : index
    %c0_11 = arith.constant 0 : index
    %15 = vector.load %arg9[%c0_10, %c0_11] : memref<16x128xf32, #tpu.memory_space<vmem>>, vector<16x128xf32>
    tpu.vector_store %arg9[%c0_10, %c0_11], %14 {strides = array<i32>} : memref<16x128xf32, #tpu.memory_space<vmem>>, vector<16x128xf32>,
    %c0_i32_12 = arith.constant 0 : i32
    %16 = arith.cmpi eq, %arg2, %c0_i32_12 : i32
    %17 = arith.extui %16 : i1 to i32
    %c0_i32_13 = arith.constant 0 : i32
    %18 = arith.cmpi ne, %17, %c0_i32_13 : i32
    scf.if %18 {
      %c0_14 = arith.constant 0 : index
      %c0_15 = arith.constant 0 : index
      %19 = vector.load %arg9[%c0_14, %c0_15] : memref<16x128xf32, #tpu.memory_space<vmem>>, vector<16x128xf32>
      %c0_16 = arith.constant 0 : index
      %c0_17 = arith.constant 0 : index
      %20 = vector.load %arg7[%c0_16, %c0_17] : memref<1x128xf32, #tpu.memory_space<vmem>>, vector<1x128xf32>
      %21 = vector.broadcast %20 : vector<1x128xf32> to vector<16x128xf32>
      %22 = arith.addf %19, %21 : vector<16x128xf32>
      %c0_18 = arith.constant 0 : index
      %c0_19 = arith.constant 0 : index
      %23 = vector.load %arg8[%c0_18, %c0_19] : memref<16x128xf32, #tpu.memory_space<vmem>>, vector<16x128xf32>
      tpu.vector_store %arg8[%c0_18, %c0_19], %22 {strides = array<i32>} : memref<16x128xf32, #tpu.memory_space<vmem>>, vector<16x128xf32>,
    } else {
    }
    return
  }
  func.func @transform_0(%arg0: i32, %arg1: i32, %arg2: i32) -> (i32, i32) {
    %c0_i32 = arith.constant 0 : i32
    return %arg0, %arg2 : i32, i32
  }
  func.func @transform_1(%arg0: i32, %arg1: i32, %arg2: i32) -> (i32, i32) {
    %c0_i32 = arith.constant 0 : i32
    %c0_i32_0 = arith.constant 0 : i32
    return %c0_i32, %arg2 : i32, i32
  }
  func.func @transform_2(%arg0: i32, %arg1: i32, %arg2: i32) -> (i32, i32) {
    %c0_i32 = arith.constant 0 : i32
    %c0_i32_0 = arith.constant 0 : i32
    return %c0_i32, %arg2 : i32, i32
  }
  func.func @transform_3(%arg0: i32, %arg1: i32, %arg2: i32) -> (i32, i32) {
    %c0_i32 = arith.constant 0 : i32
    return %arg2, %arg1 : i32, i32
  }
  func.func @transform_4(%arg0: i32, %arg1: i32, %arg2: i32) -> (i32, i32) {
    %c0_i32 = arith.constant 0 : i32
    %c0_i32_0 = arith.constant 0 : i32
    return %c0_i32, %arg1 : i32, i32
  }
  func.func @transform_5(%arg0: i32, %arg1: i32, %arg2: i32) -> (i32, i32) {
    %c0_i32 = arith.constant 0 : i32
    return %arg0, %arg1 : i32, i32
  }
}

</mosaic_0001>

<llo_original>
// kernel: wrapped_forward.1
$region0: #{wrapped_forward.1}
  #allocation0 [shape = 'u32[]', space=smem, size = 0x4, offset = 0x4, fixed_abs, tag = 'smem constant byte address 0x4 - core index']
  #allocation1 [shape = 'u32[144,128]{1,0:T(1,128)}', space=vmem, size = 0x12000, scoped, tag = 'internal scratch']
  #allocation2 [shape = 'f32[16,128]{1,0:T(8,128)}', space=vmem, size = 0x2000, scoped, tag = 'scratch operand']
  %s0 = inlined_call_operand.vmem [shape: f32[16,768], index: 0, kind: input, shape index: {}]
  %s1 = inlined_call_operand.vmem [shape: f32[1,768], index: 1, kind: input, shape index: {}]
  %s2 = inlined_call_operand.vmem [shape: f32[1,768], index: 2, kind: input, shape index: {}]
  %s3 = inlined_call_operand.hbm [shape: bf16[768,128], index: 3, kind: input, shape index: {}]
  %s4 = inlined_call_operand.vmem [shape: f32[1,128], index: 4, kind: input, shape index: {}]
  %s5 = inlined_call_operand.vmem [shape: f32[16,128], index: 5, kind: output, shape index: {}]
  %s6 = sld [smem:[#allocation0]]
  $region42: #{wrapped_forward.1} parent=0
    _
  %s8 = ssub.s32 1, %s6
  %s9 = scalar_select 0, %s8, %s6
  $region1: #{wrapped_forward.1} parent=0
    #allocation3 [shape = 'u8[196608]{0}', space=vmem, size = 0x30000, scoped, tag = 'input window, operand 3, single buffered']
    #allocation4 [shape = 's32[1]{0}', space=sflag, size = 0x4, scoped, tag = 'scoped memory for wrapped_forward.1']
    %10 = vsyncpa [#allocation4], 0
    // Predicated region
    $region2: #{wrapped_forward.1} parent=1 // pred_check
      _
    $region3: #{wrapped_forward.1} parent=1 // pred_check_branch
      %12 = sbr.rel (0) target = $region5
    $region4: #{wrapped_forward.1} parent=1 // pred_region
      _
    $region5: #{wrapped_forward.1} parent=1 // pred_fallthru
      _
    // Predicated region
    $region6: #{wrapped_forward.1} parent=1 // pred_check
      _
    $region7: #{wrapped_forward.1} parent=1 // pred_check_branch
      %14 = sbr.rel (0) target = $region9
    $region8: #{wrapped_forward.1} parent=1 // pred_region
      _
    $region9: #{wrapped_forward.1} parent=1 // pred_fallthru
      _
    // Predicated region
    $region10: #{wrapped_forward.1} parent=1 // pred_check
      _
    $region11: #{wrapped_forward.1} parent=1 // pred_check_branch
      %16 = sbr.rel (0) target = $region13
    $region12: #{wrapped_forward.1} parent=1 // pred_region
      _
    $region13: #{wrapped_forward.1} parent=1 // pred_fallthru
      _
    // Predicated region
    $region14: #{wrapped_forward.1} parent=1 // pred_check
      _
    $region15: #{wrapped_forward.1} parent=1 // pred_check_branch
      %18 = sbr.rel (0) target = $region17
    $region16: #{wrapped_forward.1} parent=1 // pred_region
      %s20 = ssub.s32 6144, 6144
      %21 = vsyncadd [#allocation4], %s20
      %s22 = sshll.u32 [#allocation3], 4
      %s23 = int_to_ptr.vmem [resolvable:$true] %s22
      %28 = dma.hbm_to_vmem [thread:$0]  %s3, 6144, %s23, [#allocation4], 64, 64, 4
    $region17: #{wrapped_forward.1} parent=1 // pred_fallthru
      _
    // Predicated region
    $region18: #{wrapped_forward.1} parent=1 // pred_check
      _
    $region19: #{wrapped_forward.1} parent=1 // pred_check_branch
      %30 = sbr.rel (0) target = $region21
    $region20: #{wrapped_forward.1} parent=1 // pred_region
      _
    $region21: #{wrapped_forward.1} parent=1 // pred_fallthru
      _
    // Predicated region
    $region22: #{wrapped_forward.1} parent=1 // pred_check
      _
    $region23: #{wrapped_forward.1} parent=1 // pred_check_branch
      %32 = sbr.rel (0) target = $region25
    $region24: #{wrapped_forward.1} parent=1 // pred_region
      %33 = dma.done [#allocation4], 6144
    $region25: #{wrapped_forward.1} parent=1 // pred_fallthru
      _
    %p35 = scmp.eq.s32.totalorder 0, 0
    // Predicated region
    $region26: #{wrapped_forward.1} parent=1 // pred_check
      %p36 = pneg %p35
    $region27: #{wrapped_forward.1} parent=1 // pred_check_branch
      %38 = sbr.rel (%p36) target = $region29
    $region28: #{wrapped_forward.1} parent=1 // pred_region
      %39 = vst [vmem:[#allocation2] sm:$0xff] 0.0
      %40 = vst [vmem:[#allocation2 + $0x8] sm:$0xff] 0.0
    $region29: #{wrapped_forward.1} parent=1 // pred_fallthru
      _
    %v41 = vld [vmem:[%s0] sm:$0xff]
    %v42 = vld [vmem:[%s0 + $0x8] sm:$0xff]
    %v43 = vld [vmem:[%s0 + $0x10] sm:$0xff]
    %v44 = vld [vmem:[%s0 + $0x18] sm:$0xff]
    %v45 = vld [vmem:[%s0 + $0x20] sm:$0xff]
    %v46 = vld [vmem:[%s0 + $0x28] sm:$0xff]
    %v47 = vld [vmem:[%s0 + $0x30] sm:$0xff]
    %v48 = vld [vmem:[%s0 + $0x38] sm:$0xff]
    %v49 = vld [vmem:[%s0 + $0x40] sm:$0xff]
    %v50 = vld [vmem:[%s0 + $0x48] sm:$0xff]
    %v51 = vld [vmem:[%s0 + $0x50] sm:$0xff]
    %v52 = vld [vmem:[%s0 + $0x58] sm:$0xff]
    %v53 = vld [vmem:[%s1] sm:$0x3f]
    %v55 = vlaneseq
    %v56 = vshrl.u32 %v55, 7
    %v57 = vsub.s32 0, %v56
    %v58 = vrot.slane %v53, %v57
    %v59 = vlaneseq
    %v60 = vshrl.u32 %v59, 7
    %v61 = vsub.s32 1, %v60
    %v62 = vrot.slane %v53, %v61
    %v63 = vlaneseq
    %v64 = vshrl.u32 %v63, 7
    %v65 = vsub.s32 2, %v64
    %v66 = vrot.slane %v53, %v65
    %v67 = vlaneseq
    %v68 = vshrl.u32 %v67, 7
    %v69 = vsub.s32 3, %v68
    %v70 = vrot.slane %v53, %v69
    %v71 = vlaneseq
    %v72 = vshrl.u32 %v71, 7
    %v73 = vsub.s32 4, %v72
    %v74 = vrot.slane %v53, %v73
    %v75 = vlaneseq
    %v76 = vshrl.u32 %v75, 7
    %v77 = vsub.s32 5, %v76
    %v78 = vrot.slane %v53, %v77
    %v85 = vmul.f32 %v41, %v58
    %v86 = vmul.f32 %v42, %v62
    %v87 = vmul.f32 %v43, %v66
    %v88 = vmul.f32 %v44, %v70
    %v89 = vmul.f32 %v45, %v74
    %v90 = vmul.f32 %v46, %v78
    %v91 = vmul.f32 %v47, %v58
    %v92 = vmul.f32 %v48, %v62
    %v93 = vmul.f32 %v49, %v66
    %v94 = vmul.f32 %v50, %v70
    %v95 = vmul.f32 %v51, %v74
    %v96 = vmul.f32 %v52, %v78
    %v97 = vld [vmem:[%s2] sm:$0x3f]
    %v99 = vlaneseq
    %v100 = vshrl.u32 %v99, 7
    %v101 = vsub.s32 0, %v100
    %v102 = vrot.slane %v97, %v101
    %v103 = vlaneseq
    %v104 = vshrl.u32 %v103, 7
    %v105 = vsub.s32 1, %v104
    %v106 = vrot.slane %v97, %v105
    %v107 = vlaneseq
    %v108 = vshrl.u32 %v107, 7
    %v109 = vsub.s32 2, %v108
    %v110 = vrot.slane %v97, %v109
    %v111 = vlaneseq
    %v112 = vshrl.u32 %v111, 7
    %v113 = vsub.s32 3, %v112
    %v114 = vrot.slane %v97, %v113
    %v115 = vlaneseq
    %v116 = vshrl.u32 %v115, 7
    %v117 = vsub.s32 4, %v116
    %v118 = vrot.slane %v97, %v117
    %v119 = vlaneseq
    %v120 = vshrl.u32 %v119, 7
    %v121 = vsub.s32 5, %v120
    %v122 = vrot.slane %v97, %v121
    %v129 = vsub.f32 %v85, %v102
    %v130 = vsub.f32 %v86, %v106
    %v131 = vsub.f32 %v87, %v110
    %v132 = vsub.f32 %v88, %v114
    %v133 = vsub.f32 %v89, %v118
    %v134 = vsub.f32 %v90, %v122
    %v135 = vsub.f32 %v91, %v102
    %v136 = vsub.f32 %v92, %v106
    %v137 = vsub.f32 %v93, %v110
    %v138 = vsub.f32 %v94, %v114
    %v139 = vsub.f32 %v95, %v118
    %v140 = vsub.f32 %v96, %v122
    %v141 = vpack.c.bf16 %v135, %v129
    %v142 = vpack.c.bf16 %v136, %v130
    %v143 = vpack.c.bf16 %v137, %v131
    %v144 = vpack.c.bf16 %v138, %v132
    %v145 = vpack.c.bf16 %v139, %v133
    %v146 = vpack.c.bf16 %v140, %v134
    %v147 = vld [vmem:[#allocation2] sm:$0xff]
    %v148 = vld [vmem:[#allocation2 + $0x8] sm:$0xff]
    %v149 = vld [vmem:[#allocation3] sm:$0xf]
    %v150 = vld [vmem:[#allocation3 + $0x4] sm:$0xf]
    %v151 = vld [vmem:[#allocation3 + $0x8] sm:$0xf]
    %v152 = vld [vmem:[#allocation3 + $0xc] sm:$0xf]
    %v153 = vld [vmem:[#allocation3 + $0x10] sm:$0xf]
    %v154 = vld [vmem:[#allocation3 + $0x14] sm:$0xf]
    %v155 = vld [vmem:[#allocation3 + $0x18] sm:$0xf]
    %v156 = vld [vmem:[#allocation3 + $0x1c] sm:$0xf]
    %v157 = vld [vmem:[#allocation3 + $0x20] sm:$0xf]
    %v158 = vld [vmem:[#allocation3 + $0x24] sm:$0xf]
    %v159 = vld [vmem:[#allocation3 + $0x28] sm:$0xf]
    %v160 = vld [vmem:[#allocation3 + $0x2c] sm:$0xf]
    %v161 = vld [vmem:[#allocation3 + $0x30] sm:$0xf]
    %v162 = vld [vmem:[#allocation3 + $0x34] sm:$0xf]
    %v163 = vld [vmem:[#allocation3 + $0x38] sm:$0xf]
    %v164 = vld [vmem:[#allocation3 + $0x3c] sm:$0xf]
    %v165 = vld [vmem:[#allocation3 + $0x40] sm:$0xf]
    %v166 = vld [vmem:[#allocation3 + $0x44] sm:$0xf]
    %v167 = vld [vmem:[#allocation3 + $0x48] sm:$0xf]
    %v168 = vld [vmem:[#allocation3 + $0x4c] sm:$0xf]
    %v169 = vld [vmem:[#allocation3 + $0x50] sm:$0xf]
    %v170 = vld [vmem:[#allocation3 + $0x54] sm:$0xf]
    %v171 = vld [vmem:[#allocation3 + $0x58] sm:$0xf]
    %v172 = vld [vmem:[#allocation3 + $0x5c] sm:$0xf]
    %v173 = vld [vmem:[#allocation3 + $0x60] sm:$0xf]
    %v174 = vld [vmem:[#allocation3 + $0x64] sm:$0xf]
    %v175 = vld [vmem:[#allocation3 + $0x68] sm:$0xf]
    %v176 = vld [vmem:[#allocation3 + $0x6c] sm:$0xf]
    %v177 = vld [vmem:[#allocation3 + $0x70] sm:$0xf]
    %v178 = vld [vmem:[#allocation3 + $0x74] sm:$0xf]
    %v179 = vld [vmem:[#allocation3 + $0x78] sm:$0xf]
    %v180 = vld [vmem:[#allocation3 + $0x7c] sm:$0xf]
    %v181 = vld [vmem:[#allocation3 + $0x80] sm:$0xf]
    %v182 = vld [vmem:[#allocation3 + $0x84] sm:$0xf]
    %v183 = vld [vmem:[#allocation3 + $0x88] sm:$0xf]
    %v184 = vld [vmem:[#allocation3 + $0x8c] sm:$0xf]
    %v185 = vld [vmem:[#allocation3 + $0x90] sm:$0xf]
    %v186 = vld [vmem:[#allocation3 + $0x94] sm:$0xf]
    %v187 = vld [vmem:[#allocation3 + $0x98] sm:$0xf]
    %v188 = vld [vmem:[#allocation3 + $0x9c] sm:$0xf]
    %v189 = vld [vmem:[#allocation3 + $0xa0] sm:$0xf]
    %v190 = vld [vmem:[#allocation3 + $0xa4] sm:$0xf]
    %v191 = vld [vmem:[#allocation3 + $0xa8] sm:$0xf]
    %v192 = vld [vmem:[#allocation3 + $0xac] sm:$0xf]
    %v193 = vld [vmem:[#allocation3 + $0xb0] sm:$0xf]
    %v194 = vld [vmem:[#allocation3 + $0xb4] sm:$0xf]
    %v195 = vld [vmem:[#allocation3 + $0xb8] sm:$0xf]
    %v196 = vld [vmem:[#allocation3 + $0xbc] sm:$0xf]
    %v197 = vld [vmem:[#allocation3 + $0xc0] sm:$0xf]
    %v198 = vld [vmem:[#allocation3 + $0xc4] sm:$0xf]
    %v199 = vld [vmem:[#allocation3 + $0xc8] sm:$0xf]
    %v200 = vld [vmem:[#allocation3 + $0xcc] sm:$0xf]
    %v201 = vld [vmem:[#allocation3 + $0xd0] sm:$0xf]
    %v202 = vld [vmem:[#allocation3 + $0xd4] sm:$0xf]
    %v203 = vld [vmem:[#allocation3 + $0xd8] sm:$0xf]
    %v204 = vld [vmem:[#allocation3 + $0xdc] sm:$0xf]
    %v205 = vld [vmem:[#allocation3 + $0xe0] sm:$0xf]
    %v206 = vld [vmem:[#allocation3 + $0xe4] sm:$0xf]
    %v207 = vld [vmem:[#allocation3 + $0xe8] sm:$0xf]
    %v208 = vld [vmem:[#allocation3 + $0xec] sm:$0xf]
    %v209 = vld [vmem:[#allocation3 + $0xf0] sm:$0xf]
    %v210 = vld [vmem:[#allocation3 + $0xf4] sm:$0xf]
    %v211 = vld [vmem:[#allocation3 + $0xf8] sm:$0xf]
    %v212 = vld [vmem:[#allocation3 + $0xfc] sm:$0xf]
    %v213 = vld [vmem:[#allocation3 + $0x100] sm:$0xf]
    %v214 = vld [vmem:[#allocation3 + $0x104] sm:$0xf]
    %v215 = vld [vmem:[#allocation3 + $0x108] sm:$0xf]
    %v216 = vld [vmem:[#allocation3 + $0x10c] sm:$0xf]
    %v217 = vld [vmem:[#allocation3 + $0x110] sm:$0xf]
    %v218 = vld [vmem:[#allocation3 + $0x114] sm:$0xf]
    %v219 = vld [vmem:[#allocation3 + $0x118] sm:$0xf]
    %v220 = vld [vmem:[#allocation3 + $0x11c] sm:$0xf]
    %v221 = vld [vmem:[#allocation3 + $0x120] sm:$0xf]
    %v222 = vld [vmem:[#allocation3 + $0x124] sm:$0xf]
    %v223 = vld [vmem:[#allocation3 + $0x128] sm:$0xf]
    %v224 = vld [vmem:[#allocation3 + $0x12c] sm:$0xf]
    %v225 = vld [vmem:[#allocation3 + $0x130] sm:$0xf]
    %v226 = vld [vmem:[#allocation3 + $0x134] sm:$0xf]
    %v227 = vld [vmem:[#allocation3 + $0x138] sm:$0xf]
    %v228 = vld [vmem:[#allocation3 + $0x13c] sm:$0xf]
    %v229 = vld [vmem:[#allocation3 + $0x140] sm:$0xf]
    %v230 = vld [vmem:[#allocation3 + $0x144] sm:$0xf]
    %v231 = vld [vmem:[#allocation3 + $0x148] sm:$0xf]
    %v232 = vld [vmem:[#allocation3 + $0x14c] sm:$0xf]
    %v233 = vld [vmem:[#allocation3 + $0x150] sm:$0xf]
    %v234 = vld [vmem:[#allocation3 + $0x154] sm:$0xf]
    %v235 = vld [vmem:[#allocation3 + $0x158] sm:$0xf]
    %v236 = vld [vmem:[#allocation3 + $0x15c] sm:$0xf]
    %v237 = vld [vmem:[#allocation3 + $0x160] sm:$0xf]
    %v238 = vld [vmem:[#allocation3 + $0x164] sm:$0xf]
    %v239 = vld [vmem:[#allocation3 + $0x168] sm:$0xf]
    %v240 = vld [vmem:[#allocation3 + $0x16c] sm:$0xf]
    %v241 = vld [vmem:[#allocation3 + $0x170] sm:$0xf]
    %v242 = vld [vmem:[#allocation3 + $0x174] sm:$0xf]
    %v243 = vld [vmem:[#allocation3 + $0x178] sm:$0xf]
    %v244 = vld [vmem:[#allocation3 + $0x17c] sm:$0xf]
    %v341 = vunpack.c.l.b16 %v149
    %v342 = vunpack.c.l.b16 %v150
    %v343 = vunpack.c.l.b16 %v151
    %v344 = vunpack.c.l.b16 %v152
    %v345 = vunpack.c.l.b16 %v153
    %v346 = vunpack.c.l.b16 %v154
    %v347 = vunpack.c.l.b16 %v155
    %v348 = vunpack.c.l.b16 %v156
    %v349 = vunpack.c.l.b16 %v157
    %v350 = vunpack.c.l.b16 %v158
    %v351 = vunpack.c.l.b16 %v159
    %v352 = vunpack.c.l.b16 %v160
    %v353 = vunpack.c.l.b16 %v161
    %v354 = vunpack.c.l.b16 %v162
    %v355 = vunpack.c.l.b16 %v163
    %v356 = vunpack.c.l.b16 %v164
    %v357 = vunpack.c.l.b16 %v165
    %v358 = vunpack.c.l.b16 %v166
    %v359 = vunpack.c.l.b16 %v167
    %v360 = vunpack.c.l.b16 %v168
    %v361 = vunpack.c.l.b16 %v169
    %v362 = vunpack.c.l.b16 %v170
    %v363 = vunpack.c.l.b16 %v171
    %v364 = vunpack.c.l.b16 %v172
    %v365 = vunpack.c.l.b16 %v173
    %v366 = vunpack.c.l.b16 %v174
    %v367 = vunpack.c.l.b16 %v175
    %v368 = vunpack.c.l.b16 %v176
    %v369 = vunpack.c.l.b16 %v177
    %v370 = vunpack.c.l.b16 %v178
    %v371 = vunpack.c.l.b16 %v179
    %v372 = vunpack.c.l.b16 %v180
    %v373 = vunpack.c.l.b16 %v181
    %v374 = vunpack.c.l.b16 %v182
    %v375 = vunpack.c.l.b16 %v183
    %v376 = vunpack.c.l.b16 %v184
    %v377 = vunpack.c.l.b16 %v185
    %v378 = vunpack.c.l.b16 %v186
    %v379 = vunpack.c.l.b16 %v187
    %v380 = vunpack.c.l.b16 %v188
    %v381 = vunpack.c.l.b16 %v189
    %v382 = vunpack.c.l.b16 %v190
    %v383 = vunpack.c.l.b16 %v191
    %v384 = vunpack.c.l.b16 %v192
    %v385 = vunpack.c.l.b16 %v193
    %v386 = vunpack.c.l.b16 %v194
    %v387 = vunpack.c.l.b16 %v195
    %v388 = vunpack.c.l.b16 %v196
    %v389 = vunpack.c.l.b16 %v197
    %v390 = vunpack.c.l.b16 %v198
    %v391 = vunpack.c.l.b16 %v199
    %v392 = vunpack.c.l.b16 %v200
    %v393 = vunpack.c.l.b16 %v201
    %v394 = vunpack.c.l.b16 %v202
    %v395 = vunpack.c.l.b16 %v203
    %v396 = vunpack.c.l.b16 %v204
    %v397 = vunpack.c.l.b16 %v205
    %v398 = vunpack.c.l.b16 %v206
    %v399 = vunpack.c.l.b16 %v207
    %v400 = vunpack.c.l.b16 %v208
    %v401 = vunpack.c.l.b16 %v209
    %v402 = vunpack.c.l.b16 %v210
    %v403 = vunpack.c.l.b16 %v211
    %v404 = vunpack.c.l.b16 %v212
    %v405 = vunpack.c.l.b16 %v213
    %v406 = vunpack.c.l.b16 %v214
    %v407 = vunpack.c.l.b16 %v215
    %v408 = vunpack.c.l.b16 %v216
    %v409 = vunpack.c.l.b16 %v217
    %v410 = vunpack.c.l.b16 %v218
    %v411 = vunpack.c.l.b16 %v219
    %v412 = vunpack.c.l.b16 %v220
    %v413 = vunpack.c.l.b16 %v221
    %v414 = vunpack.c.l.b16 %v222
    %v415 = vunpack.c.l.b16 %v223
    %v416 = vunpack.c.l.b16 %v224
    %v417 = vunpack.c.l.b16 %v225
    %v418 = vunpack.c.l.b16 %v226
    %v419 = vunpack.c.l.b16 %v227
    %v420 = vunpack.c.l.b16 %v228
    %v421 = vunpack.c.l.b16 %v229
    %v422 = vunpack.c.l.b16 %v230
    %v423 = vunpack.c.l.b16 %v231
    %v424 = vunpack.c.l.b16 %v232
    %v425 = vunpack.c.l.b16 %v233
    %v426 = vunpack.c.l.b16 %v234
    %v427 = vunpack.c.l.b16 %v235
    %v428 = vunpack.c.l.b16 %v236
    %v429 = vunpack.c.l.b16 %v237
    %v430 = vunpack.c.l.b16 %v238
    %v431 = vunpack.c.l.b16 %v239
    %v432 = vunpack.c.l.b16 %v240
    %v433 = vunpack.c.l.b16 %v241
    %v434 = vunpack.c.l.b16 %v242
    %v435 = vunpack.c.l.b16 %v243
    %v436 = vunpack.c.l.b16 %v244
    %v437 = vpack.c.b16 %v342, %v341
    %v438 = vpack.c.b16 %v344, %v343
    %v439 = vpack.c.b16 %v346, %v345
    %v440 = vpack.c.b16 %v348, %v347
    %v441 = vpack.c.b16 %v350, %v349
    %v442 = vpack.c.b16 %v352, %v351
    %v443 = vpack.c.b16 %v354, %v353
    %v444 = vpack.c.b16 %v356, %v355
    %v445 = vpack.c.b16 %v358, %v357
    %v446 = vpack.c.b16 %v360, %v359
    %v447 = vpack.c.b16 %v362, %v361
    %v448 = vpack.c.b16 %v364, %v363
    %v449 = vpack.c.b16 %v366, %v365
    %v450 = vpack.c.b16 %v368, %v367
    %v451 = vpack.c.b16 %v370, %v369
    %v452 = vpack.c.b16 %v372, %v371
    %v453 = vpack.c.b16 %v374, %v373
    %v454 = vpack.c.b16 %v376, %v375
    %v455 = vpack.c.b16 %v378, %v377
    %v456 = vpack.c.b16 %v380, %v379
    %v457 = vpack.c.b16 %v382, %v381
    %v458 = vpack.c.b16 %v384, %v383
    %v459 = vpack.c.b16 %v386, %v385
    %v460 = vpack.c.b16 %v388, %v387
    %v461 = vpack.c.b16 %v390, %v389
    %v462 = vpack.c.b16 %v392, %v391
    %v463 = vpack.c.b16 %v394, %v393
    %v464 = vpack.c.b16 %v396, %v395
    %v465 = vpack.c.b16 %v398, %v397
    %v466 = vpack.c.b16 %v400, %v399
    %v467 = vpack.c.b16 %v402, %v401
    %v468 = vpack.c.b16 %v404, %v403
    %v469 = vpack.c.b16 %v406, %v405
    %v470 = vpack.c.b16 %v408, %v407
    %v471 = vpack.c.b16 %v410, %v409
    %v472 = vpack.c.b16 %v412, %v411
    %v473 = vpack.c.b16 %v414, %v413
    %v474 = vpack.c.b16 %v416, %v415
    %v475 = vpack.c.b16 %v418, %v417
    %v476 = vpack.c.b16 %v420, %v419
    %v477 = vpack.c.b16 %v422, %v421
    %v478 = vpack.c.b16 %v424, %v423
    %v479 = vpack.c.b16 %v426, %v425
    %v480 = vpack.c.b16 %v428, %v427
    %v481 = vpack.c.b16 %v430, %v429
    %v482 = vpack.c.b16 %v432, %v431
    %v483 = vpack.c.b16 %v434, %v433
    %v484 = vpack.c.b16 %v436, %v435
    %533 = vmatprep.subr.bf16.mxu0 0
    %534 = vmatpush1.bf16.msra.mxu0 %v437
    %535 = vmatprep.subr.bf16.mxu0 0
    %536 = vmatpush1.bf16.msra.mxu0 %v438
    %537 = vmatprep.subr.bf16.mxu0 0
    %538 = vmatpush1.bf16.msra.mxu0 %v439
    %539 = vmatprep.subr.bf16.mxu0 0
    %540 = vmatpush1.bf16.msra.mxu0 %v440
    %541 = vmatprep.subr.bf16.mxu0 0
    %542 = vmatpush1.bf16.msra.mxu0 %v441
    %543 = vmatprep.subr.bf16.mxu0 0
    %544 = vmatpush1.bf16.msra.mxu0 %v442
    %545 = vmatprep.subr.bf16.mxu0 0
    %546 = vmatpush1.bf16.msra.mxu0 %v443
    %547 = vmatprep.subr.bf16.mxu0 0
    %548 = vmatpush1.bf16.msra.mxu0 %v444
    %549 = vmatprep.subr.bf16.mxu0 0
    %550 = vmatpush1.bf16.msra.mxu0 %v445
    %551 = vmatprep.subr.bf16.mxu0 0
    %552 = vmatpush1.bf16.msra.mxu0 %v446
    %553 = vmatprep.subr.bf16.mxu0 0
    %554 = vmatpush1.bf16.msra.mxu0 %v447
    %555 = vmatprep.subr.bf16.mxu0 0
    %556 = vmatpush1.bf16.msra.mxu0 %v448
    %557 = vmatprep.subr.bf16.mxu0 0
    %558 = vmatpush1.bf16.msra.mxu0 %v449
    %559 = vmatprep.subr.bf16.mxu0 0
    %560 = vmatpush1.bf16.msra.mxu0 %v450
    %561 = vmatprep.subr.bf16.mxu0 0
    %562 = vmatpush1.bf16.msra.mxu0 %v451
    %563 = vmatprep.subr.bf16.mxu0 0
    %564 = vmatpush1.bf16.msra.mxu0 %v452
    %565 = vmatprep.mubr.bf16.mxu0 %v142
    %566 = vmatmul.mubr.bf16.gmra.mrb[0].mxu0 %v141
    %v567 = vpop.f32.mrb[0].mxu0
    %v568 = vadd.f32 0.0, %v567
    %v569 = vpop.f32.mrb[0].mxu0
    %v570 = vpop.f32.mrb[0].mxu0
    %v571 = vadd.f32 0.0, %v570
    %v572 = vpop.f32.mrb[0].mxu0
    %573 = vdwg.mxu0
    %574 = vmatprep.subr.bf16.mxu0 0
    %575 = vmatpush1.bf16.msra.mxu0 %v453
    %576 = vmatprep.subr.bf16.mxu0 0
    %577 = vmatpush1.bf16.msra.mxu0 %v454
    %578 = vmatprep.subr.bf16.mxu0 0
    %579 = vmatpush1.bf16.msra.mxu0 %v455
    %580 = vmatprep.subr.bf16.mxu0 0
    %581 = vmatpush1.bf16.msra.mxu0 %v456
    %582 = vmatprep.subr.bf16.mxu0 0
    %583 = vmatpush1.bf16.msra.mxu0 %v457
    %584 = vmatprep.subr.bf16.mxu0 0
    %585 = vmatpush1.bf16.msra.mxu0 %v458
    %586 = vmatprep.subr.bf16.mxu0 0
    %587 = vmatpush1.bf16.msra.mxu0 %v459
    %588 = vmatprep.subr.bf16.mxu0 0
    %589 = vmatpush1.bf16.msra.mxu0 %v460
    %590 = vmatprep.subr.bf16.mxu0 0
    %591 = vmatpush1.bf16.msra.mxu0 %v461
    %592 = vmatprep.subr.bf16.mxu0 0
    %593 = vmatpush1.bf16.msra.mxu0 %v462
    %594 = vmatprep.subr.bf16.mxu0 0
    %595 = vmatpush1.bf16.msra.mxu0 %v463
    %596 = vmatprep.subr.bf16.mxu0 0
    %597 = vmatpush1.bf16.msra.mxu0 %v464
    %598 = vmatprep.subr.bf16.mxu0 0
    %599 = vmatpush1.bf16.msra.mxu0 %v465
    %600 = vmatprep.subr.bf16.mxu0 0
    %601 = vmatpush1.bf16.msra.mxu0 %v466
    %602 = vmatprep.subr.bf16.mxu0 0
    %603 = vmatpush1.bf16.msra.mxu0 %v467
    %604 = vmatprep.subr.bf16.mxu0 0
    %605 = vmatpush1.bf16.msra.mxu0 %v468
    %606 = vmatprep.mubr.bf16.mxu0 %v144
    %607 = vmatmul.mubr.bf16.gmra.mrb[0].mxu0 %v143
    %v608 = vpop.f32.mrb[0].mxu0
    %v609 = vadd.f32 %v568, %v608
    %v610 = vpop.f32.mrb[0].mxu0
    %v611 = vpop.f32.mrb[0].mxu0
    %v612 = vadd.f32 %v571, %v611
    %v613 = vpop.f32.mrb[0].mxu0
    %614 = vdwg.mxu0
    %615 = vmatprep.subr.bf16.mxu0 0
    %616 = vmatpush1.bf16.msra.mxu0 %v469
    %617 = vmatprep.subr.bf16.mxu0 0
    %618 = vmatpush1.bf16.msra.mxu0 %v470
    %619 = vmatprep.subr.bf16.mxu0 0
    %620 = vmatpush1.bf16.msra.mxu0 %v471
    %621 = vmatprep.subr.bf16.mxu0 0
    %622 = vmatpush1.bf16.msra.mxu0 %v472
    %623 = vmatprep.subr.bf16.mxu0 0
    %624 = vmatpush1.bf16.msra.mxu0 %v473
    %625 = vmatprep.subr.bf16.mxu0 0
    %626 = vmatpush1.bf16.msra.mxu0 %v474
    %627 = vmatprep.subr.bf16.mxu0 0
    %628 = vmatpush1.bf16.msra.mxu0 %v475
    %629 = vmatprep.subr.bf16.mxu0 0
    %630 = vmatpush1.bf16.msra.mxu0 %v476
    %631 = vmatprep.subr.bf16.mxu0 0
    %632 = vmatpush1.bf16.msra.mxu0 %v477
    %633 = vmatprep.subr.bf16.mxu0 0
    %634 = vmatpush1.bf16.msra.mxu0 %v478
    %635 = vmatprep.subr.bf16.mxu0 0
    %636 = vmatpush1.bf16.msra.mxu0 %v479
    %637 = vmatprep.subr.bf16.mxu0 0
    %638 = vmatpush1.bf16.msra.mxu0 %v480
    %639 = vmatprep.subr.bf16.mxu0 0
    %640 = vmatpush1.bf16.msra.mxu0 %v481
    %641 = vmatprep.subr.bf16.mxu0 0
    %642 = vmatpush1.bf16.msra.mxu0 %v482
    %643 = vmatprep.subr.bf16.mxu0 0
    %644 = vmatpush1.bf16.msra.mxu0 %v483
    %645 = vmatprep.subr.bf16.mxu0 0
    %646 = vmatpush1.bf16.msra.mxu0 %v484
    %647 = vmatprep.mubr.bf16.mxu0 %v146
    %648 = vmatmul.mubr.bf16.gmra.mrb[0].mxu0 %v145
    %v649 = vpop.f32.mrb[0].mxu0
    %v650 = vadd.f32 %v609, %v649
    %v651 = vpop.f32.mrb[0].mxu0
    %v652 = vpop.f32.mrb[0].mxu0
    %v653 = vadd.f32 %v612, %v652
    %v654 = vpop.f32.mrb[0].mxu0
    %655 = vdwg.mxu0
    %v656 = vadd.f32 %v147, %v650
    %v657 = vadd.f32 %v148, %v653
    %658 = vst [vmem:[#allocation2] sm:$0xff] %v656
    %659 = vst [vmem:[#allocation2 + $0x8] sm:$0xff] %v657
    // Predicated region
    $region30: #{wrapped_forward.1} parent=1 // pred_check
      %p660 = pneg %p35
    $region31: #{wrapped_forward.1} parent=1 // pred_check_branch
      %662 = sbr.rel (%p660) target = $region33
    $region32: #{wrapped_forward.1} parent=1 // pred_region
      %v663 = vld [vmem:[#allocation2] sm:$0xff]
      %v664 = vld [vmem:[#allocation2 + $0x8] sm:$0xff]
      %v665 = vld [vmem:[%s4] sm:$0x1]
      %v667 = vlaneseq
      %v668 = vshrl.u32 %v667, 7
      %v669 = vsub.s32 0, %v668
      %v670 = vrot.slane %v665, %v669
      %v672 = vadd.f32 %v663, %v670
      %v673 = vadd.f32 %v664, %v670
      %674 = vst [vmem:[%s5] sm:$0xff] %v672
      %675 = vst [vmem:[%s5 + $0x8] sm:$0xff] %v673
    $region33: #{wrapped_forward.1} parent=1 // pred_fallthru
      _
    // Predicated region
    $region34: #{wrapped_forward.1} parent=1 // pred_check
      _
    $region35: #{wrapped_forward.1} parent=1 // pred_check_branch
      %677 = sbr.rel (0) target = $region37
    $region36: #{wrapped_forward.1} parent=1 // pred_region
      _
    $region37: #{wrapped_forward.1} parent=1 // pred_fallthru
      _
    // Predicated region
    $region38: #{wrapped_forward.1} parent=1 // pred_check
      _
    $region39: #{wrapped_forward.1} parent=1 // pred_check_branch
      %679 = sbr.rel (0) target = $region41
    $region40: #{wrapped_forward.1} parent=1 // pred_region
      _
    $region41: #{wrapped_forward.1} parent=1 // pred_fallthru
      _
    %680 = vsyncpa [#allocation4], 1

</llo_original>
